<compile_context>
chip_gen: v5e
topology: v5e:2x2
jax: 0.10.0
libtpu: 0.0.40
codegen_flags: <defaults>
</compile_context>

<pallas_src>
import functools

import jax
import jax.numpy as jnp
from jax.experimental import pallas as pl
from jax.experimental.pallas import tpu as pltpu


def _sac_actor_kernel(x_ref, p_ref, out_ref, *, input_size, hidden, out2):
    """Fused forward on one batch tile.

    x_ref:   [TB, input_size]
    p_ref:   [R, C] packed params (rows: w1 | b1 | w2 | b2 | w_heads | b_heads)
    out_ref: [TB, out2]  (out2 = 2 * output_size; [:out] = mean, [out:] = log_std)
    """
    x = x_ref[...]

    # static row offsets into the packed parameter block
    o1 = 0
    o2 = input_size + 1            # after w1 (input_size rows) + b1 (1 row)
    o3 = o2 + hidden + 1           # after w2 (hidden rows) + b2 (1 row)

    w1 = p_ref[o1:o1 + input_size, 0:hidden]
    b1 = p_ref[o1 + input_size:o1 + input_size + 1, 0:hidden]
    w2 = p_ref[o2:o2 + hidden, 0:hidden]
    b2 = p_ref[o2 + hidden:o2 + hidden + 1, 0:hidden]
    wh = p_ref[o3:o3 + hidden, 0:out2]
    bh = p_ref[o3 + hidden:o3 + hidden + 1, 0:out2]

    # trunk
    h1 = jnp.maximum(jnp.dot(x, w1, preferred_element_type=jnp.float32) + b1, 0.0)
    h2 = jnp.maximum(jnp.dot(h1, w2, preferred_element_type=jnp.float32) + b2, 0.0)

    # fused heads: one matmul, one store
    out_ref[...] = (jnp.dot(h2, wh, preferred_element_type=jnp.float32)
                    + bh).astype(out_ref.dtype)


def _pack_params(params, input_size, hidden, out_size):
    """Packs all weights/biases into one [R, C] f32 buffer (zero-padded lanes)."""
    c = max(hidden, 2 * out_size)

    def padc(a):
        return jnp.pad(a, ((0, 0), (0, c - a.shape[1])))

    w_heads = jnp.concatenate([params["wm"], params["ws"]], axis=1)  # [hidden, 2*out]
    b_heads = jnp.concatenate([params["bm"], params["bs"]], axis=1)  # [1, 2*out]

    rows = [padc(params["w1"]), padc(params["b1"]),
            padc(params["w2"]), padc(params["b2"]),
            padc(w_heads), padc(b_heads)]
    return jnp.concatenate(rows, axis=0)  # [input+1 + hidden+1 + hidden+1, c]


def sac_actor_forward(state, params):
    """Fused SacActor forward. state: [B, input_size]; returns (mean, log_std)."""
    b, input_size = state.shape
    hidden = params["w1"].shape[1]
    out_size = params["wm"].shape[1]
    out2 = 2 * out_size

    packed = _pack_params(params, input_size, hidden, out_size)
    r, c = packed.shape

    # Batch tile: whole batch if small (block == full array is exempt from the
    # (8,128) rule); otherwise a multiple-of-8 tile so the pipeline overlaps
    # the next tile's DMA with compute while weights stay VMEM-resident.
    tb = b if b <= 1024 else 1024
    grid = (pl.cdiv(b, tb),)

    kernel = functools.partial(_sac_actor_kernel,
                               input_size=input_size, hidden=hidden, out2=out2)

    out = pl.pallas_call(
        kernel,
        out_shape=jax.ShapeDtypeStruct((b, out2), jnp.float32),
        grid=grid,
        in_specs=[
            pl.BlockSpec((tb, input_size), lambda i: (i, 0)),   # state tile
            pl.BlockSpec((r, c), lambda i: (0, 0)),             # params, resident
        ],
        out_specs=pl.BlockSpec((tb, out2), lambda i: (i, 0)),
        compiler_params=pltpu.CompilerParams(
            dimension_semantics=("parallel",)),
    )(state, packed)

    mean = out[:, :out_size]
    log_std = out[:, out_size:]
    return mean, log_std


def init_params(key, input_size, output_size, hidden_size):
    """Deterministic init mimicking nn.Linear's U(-1/sqrt(fan_in), 1/sqrt(fan_in))."""
    def linear(key, fan_in, fan_out):
        kw, kb = jax.random.split(key)
        bound = 1.0 / jnp.sqrt(fan_in)
        w = jax.random.uniform(kw, (fan_in, fan_out), jnp.float32, -bound, bound)
        b = jax.random.uniform(kb, (1, fan_out), jnp.float32, -bound, bound)
        return w, b

    k1, k2, k3, k4 = jax.random.split(key, 4)
    w1, b1 = linear(k1, input_size, hidden_size)
    w2, b2 = linear(k2, hidden_size, hidden_size)
    wm, bm = linear(k3, hidden_size, output_size)
    ws, bs = linear(k4, hidden_size, output_size)
    return dict(w1=w1, b1=b1, w2=w2, b2=b2, wm=wm, bm=bm, ws=ws, bs=bs)


def reference_forward(state, p):
    h1 = jnp.maximum(state @ p["w1"] + p["b1"], 0.0)
    h2 = jnp.maximum(h1 @ p["w2"] + p["b2"], 0.0)
    return h2 @ p["wm"] + p["bm"], h2 @ p["ws"] + p["bs"]


if __name__ == "__main__":
    # LunarLanderContinuous-like sizes: obs dim 8, action dim 2.
    batch, input_size, output_size, hidden_size = 4, 8, 2, 32

    key = jax.random.PRNGKey(0)
    k_state, k_params = jax.random.split(key)
    state = jax.random.normal(k_state, (batch, input_size), jnp.float32)
    params = init_params(k_params, input_size, output_size, hidden_size)

    mean, log_std = jax.jit(sac_actor_forward)(state, params)
    jax.block_until_ready((mean, log_std))

    # sanity check against plain-JAX reference
    mean_ref, log_std_ref = reference_forward(state, params)
    assert mean.shape == (batch, output_size) and log_std.shape == (batch, output_size)
    assert jnp.allclose(mean, mean_ref, atol=1e-5), "mean mismatch"
    assert jnp.allclose(log_std, log_std_ref, atol=1e-5), "log_std mismatch"

    print("KERNEL_OK")
</pallas_src>

<mosaic_0001>
module attributes {stable_mosaic.version = 11 : i64} {
  func.func @_sac_actor_kernel(%arg0: i32, %arg1: memref<4x8xf32, #tpu.memory_space<vmem>>, %arg2: memref<75x32xf32, #tpu.memory_space<vmem>>, %arg3: memref<4x4xf32, #tpu.memory_space<vmem>>) attributes {dimension_semantics = [#tpu.dimension_semantics<parallel>], iteration_bounds = array<i64: 1>, scalar_prefetch = 0 : i64, scratch_operands = 0 : i64, tpu.core_type = #tpu.core_type<tc>, window_params = [{transform_indices = @transform_0, window_bounds = array<i64: 4, 8>}, {pipeline_mode = #tpu.pipeline_mode<synchronous>, transform_indices = @transform_1, window_bounds = array<i64: 75, 32>}, {transform_indices = @transform_2, window_bounds = array<i64: 4, 4>}]} {
    %c0 = arith.constant 0 : index
    %c0_0 = arith.constant 0 : index
    %0 = vector.load %arg1[%c0, %c0_0] : memref<4x8xf32, #tpu.memory_space<vmem>>, vector<4x8xf32>
    %c0_1 = arith.constant 0 : index
    %c0_2 = arith.constant 0 : index
    %1 = vector.load %arg2[%c0_1, %c0_2] : memref<75x32xf32, #tpu.memory_space<vmem>>, vector<8x32xf32>
    %c8 = arith.constant 8 : index
    %c0_3 = arith.constant 0 : index
    %2 = vector.load %arg2[%c8, %c0_3] : memref<75x32xf32, #tpu.memory_space<vmem>>, vector<1x32xf32>
    %c9 = arith.constant 9 : index
    %c0_4 = arith.constant 0 : index
    %3 = vector.load %arg2[%c9, %c0_4] : memref<75x32xf32, #tpu.memory_space<vmem>>, vector<32x32xf32>
    %c41 = arith.constant 41 : index
    %c0_5 = arith.constant 0 : index
    %4 = vector.load %arg2[%c41, %c0_5] : memref<75x32xf32, #tpu.memory_space<vmem>>, vector<1x32xf32>
    %c42 = arith.constant 42 : index
    %c0_6 = arith.constant 0 : index
    %5 = vector.load %arg2[%c42, %c0_6] : memref<75x32xf32, #tpu.memory_space<vmem>>, vector<32x4xf32>
    %c74 = arith.constant 74 : index
    %c0_7 = arith.constant 0 : index
    %6 = vector.load %arg2[%c74, %c0_7] : memref<75x32xf32, #tpu.memory_space<vmem>>, vector<1x4xf32>
    %cst = arith.constant dense<0.000000e+00> : vector<4x32xf32>
    %7 = tpu.matmul %0, %1, %cst {dimension_numbers = #tpu.dot_dimension_numbers<[1], [0], [0], [1], [0, 0, 1, 1], [], []>} : vector<4x8xf32>, vector<8x32xf32>, vector<4x32xf32> -> vector<4x32xf32>
    %8 = vector.broadcast %2 : vector<1x32xf32> to vector<4x32xf32>
    %9 = arith.addf %7, %8 : vector<4x32xf32>
    %cst_8 = arith.constant 0.000000e+00 : f32
    %10 = vector.broadcast %cst_8 : f32 to vector<4x32xf32>
    %11 = arith.maximumf %9, %10 : vector<4x32xf32>
    %cst_9 = arith.constant dense<0.000000e+00> : vector<4x32xf32>
    %12 = tpu.matmul %11, %3, %cst_9 {dimension_numbers = #tpu.dot_dimension_numbers<[1], [0], [0], [1], [0, 0, 1, 1], [], []>} : vector<4x32xf32>, vector<32x32xf32>, vector<4x32xf32> -> vector<4x32xf32>
    %13 = vector.broadcast %4 : vector<1x32xf32> to vector<4x32xf32>
    %14 = arith.addf %12, %13 : vector<4x32xf32>
    %cst_10 = arith.constant 0.000000e+00 : f32
    %15 = vector.broadcast %cst_10 : f32 to vector<4x32xf32>
    %16 = arith.maximumf %14, %15 : vector<4x32xf32>
    %cst_11 = arith.constant dense<0.000000e+00> : vector<4x4xf32>
    %17 = tpu.matmul %16, %5, %cst_11 {dimension_numbers = #tpu.dot_dimension_numbers<[1], [0], [0], [1], [0, 0, 1, 1], [], []>} : vector<4x32xf32>, vector<32x4xf32>, vector<4x4xf32> -> vector<4x4xf32>
    %18 = vector.broadcast %6 : vector<1x4xf32> to vector<4x4xf32>
    %19 = arith.addf %17, %18 : vector<4x4xf32>
    %c0_12 = arith.constant 0 : index
    %c0_13 = arith.constant 0 : index
    %20 = vector.load %arg3[%c0_12, %c0_13] : memref<4x4xf32, #tpu.memory_space<vmem>>, vector<4x4xf32>
    tpu.vector_store %arg3[%c0_12, %c0_13], %19 {strides = array<i32>} : memref<4x4xf32, #tpu.memory_space<vmem>>, vector<4x4xf32>,
    return
  }
  func.func @transform_0(%arg0: i32) -> (i32, i32) {
    %c0_i32 = arith.constant 0 : i32
    %c0_i32_0 = arith.constant 0 : i32
    return %arg0, %c0_i32 : i32, i32
  }
  func.func @transform_1(%arg0: i32) -> (i32, i32) {
    %c0_i32 = arith.constant 0 : i32
    %c0_i32_0 = arith.constant 0 : i32
    %c0_i32_1 = arith.constant 0 : i32
    return %c0_i32, %c0_i32_0 : i32, i32
  }
  func.func @transform_2(%arg0: i32) -> (i32, i32) {
    %c0_i32 = arith.constant 0 : i32
    %c0_i32_0 = arith.constant 0 : i32
    return %arg0, %c0_i32 : i32, i32
  }
}

</mosaic_0001>

<llo_original>
// kernel: sac_actor_forward.1
$region0: #{sac_actor_forward.1}
  #allocation0 [shape = 'u32[]', space=smem, size = 0x4, offset = 0x4, fixed_abs, tag = 'smem constant byte address 0x4 - core index']
  #allocation1 [shape = 'u32[72,128]{1,0:T(1,128)}', space=vmem, size = 0x9000, scoped, tag = 'internal scratch']
  %s0 = inlined_call_operand.vmem [shape: f32[4,8], index: 0, kind: input, shape index: {}]
  %s1 = inlined_call_operand.vmem [shape: f32[75,32], index: 1, kind: input, shape index: {}]
  %s2 = inlined_call_operand.vmem [shape: f32[4,4], index: 2, kind: output, shape index: {}]
  %s3 = sld [smem:[#allocation0]]
  $region18: #{sac_actor_forward.1} parent=0
    _
  %s5 = ssub.s32 1, %s3
  %s6 = scalar_select 0, %s5, %s3
  // Predicated region
  $region2: #{sac_actor_forward.1} parent=0 // pred_check
    _
  $region3: #{sac_actor_forward.1} parent=0 // pred_check_branch
    %8 = sbr.rel (0) target = $region5
  $region4: #{sac_actor_forward.1} parent=0 // pred_region
    _
  $region5: #{sac_actor_forward.1} parent=0 // pred_fallthru
    _
  // Predicated region
  $region6: #{sac_actor_forward.1} parent=0 // pred_check
    _
  $region7: #{sac_actor_forward.1} parent=0 // pred_check_branch
    %10 = sbr.rel (0) target = $region9
  $region8: #{sac_actor_forward.1} parent=0 // pred_region
    _
  $region9: #{sac_actor_forward.1} parent=0 // pred_fallthru
    _
  %v11 = vld [vmem:[%s0] sm:$0xf]
  %v12 = vld [vmem:[%s1] sm:$0xff]
  %v13 = vld [vmem:[%s1 + $0x8] sm:$0x1]
  %v14 = vld [vmem:[%s1 + $0x9] sm:$0xff]
  %v15 = vld [vmem:[%s1 + $0x11] sm:$0xff]
  %v16 = vld [vmem:[%s1 + $0x19] sm:$0xff]
  %v17 = vld [vmem:[%s1 + $0x21] sm:$0xff]
  %v18 = vld [vmem:[%s1 + $0x29] sm:$0x1]
  %v19 = vld [vmem:[%s1 + $0x2a] sm:$0xff]
  %v20 = vld [vmem:[%s1 + $0x32] sm:$0xff]
  %v21 = vld [vmem:[%s1 + $0x3a] sm:$0xff]
  %v22 = vld [vmem:[%s1 + $0x42] sm:$0xff]
  %v23 = vld [vmem:[%s1 + $0x4a] sm:$0x1]
  %v24 = vperm.slane %v13, 0
  %vm25 = vcmask 64512
  %v27 = vsel %vm25, %v11, 0
  %29 = vmatpush.msra.mxu0 0.0
  %30 = vmatpush.msra.mxu0 0.0
  %31 = vmatpush.msra.mxu0 0.0
  %32 = vmatpush.msra.mxu0 0.0
  %33 = vmatpush.msra.mxu0 0.0
  %34 = vmatpush.msra.mxu0 0.0
  %35 = vmatpush.msra.mxu0 0.0
  %36 = vmatpush.msra.mxu0 0.0
  %37 = vmatpush.msra.mxu0 0.0
  %38 = vmatpush.msra.mxu0 0.0
  %39 = vmatpush.msra.mxu0 0.0
  %40 = vmatpush.msra.mxu0 0.0
  %41 = vmatpush.msra.mxu0 0.0
  %42 = vmatpush.msra.mxu0 0.0
  %43 = vmatpush.msra.mxu0 0.0
  %44 = vmatpush.msra.mxu0 %v12
  %45 = vmatmul.f32.gmra.mxu0 %v27
  %v46 = vpop.f32.mrf.mxu0
  %v47 = vadd.f32 %v24, %v46
  %48 = vdwg.mxu0
  %v49 = vmax.f32 %v47, 0.0
  %v50 = vperm.slane %v18, 0
  %vm51 = vcmask 261120
  %v53 = vsel %vm51, %v49, 0
  %55 = vmatpush.msra.mxu0 0.0
  %56 = vmatpush.msra.mxu0 0.0
  %57 = vmatpush.msra.mxu0 0.0
  %58 = vmatpush.msra.mxu0 0.0
  %59 = vmatpush.msra.mxu0 0.0
  %60 = vmatpush.msra.mxu0 0.0
  %61 = vmatpush.msra.mxu0 0.0
  %62 = vmatpush.msra.mxu0 0.0
  %63 = vmatpush.msra.mxu0 0.0
  %64 = vmatpush.msra.mxu0 0.0
  %65 = vmatpush.msra.mxu0 0.0
  %66 = vmatpush.msra.mxu0 0.0
  %67 = vmatpush.msra.mxu0 %v17
  %68 = vmatpush.msra.mxu0 %v16
  %69 = vmatpush.msra.mxu0 %v15
  %70 = vmatpush.msra.mxu0 %v14
  %71 = vmatmul.f32.gmra.mxu0 %v53
  %v72 = vpop.f32.mrf.mxu0
  %v73 = vadd.f32 %v50, %v72
  %74 = vdwg.mxu0
  %v75 = vmax.f32 %v73, 0.0
  %v76 = vperm.slane %v23, 0
  %v78 = vsel %vm51, %v75, 0
  %80 = vmatpush.msra.mxu0 0.0
  %81 = vmatpush.msra.mxu0 0.0
  %82 = vmatpush.msra.mxu0 0.0
  %83 = vmatpush.msra.mxu0 0.0
  %84 = vmatpush.msra.mxu0 0.0
  %85 = vmatpush.msra.mxu0 0.0
  %86 = vmatpush.msra.mxu0 0.0
  %87 = vmatpush.msra.mxu0 0.0
  %88 = vmatpush.msra.mxu0 0.0
  %89 = vmatpush.msra.mxu0 0.0
  %90 = vmatpush.msra.mxu0 0.0
  %91 = vmatpush.msra.mxu0 0.0
  %92 = vmatpush.msra.mxu0 %v22
  %93 = vmatpush.msra.mxu0 %v21
  %94 = vmatpush.msra.mxu0 %v20
  %95 = vmatpush.msra.mxu0 %v19
  %96 = vmatmul.f32.gmra.mxu0 %v78
  %v97 = vpop.f32.mrf.mxu0
  %v98 = vadd.f32 %v76, %v97
  %99 = vdwg.mxu0
  %vm100 = vcmask 27648
  %101 = vst.msk [vmem:[%s2] sm:$0xf] %vm100, %v98
  // Predicated region
  $region10: #{sac_actor_forward.1} parent=0 // pred_check
    _
  $region11: #{sac_actor_forward.1} parent=0 // pred_check_branch
    %103 = sbr.rel (0) target = $region13
  $region12: #{sac_actor_forward.1} parent=0 // pred_region
    _
  $region13: #{sac_actor_forward.1} parent=0 // pred_fallthru
    _
  // Predicated region
  $region14: #{sac_actor_forward.1} parent=0 // pred_check
    _
  $region15: #{sac_actor_forward.1} parent=0 // pred_check_branch
    %105 = sbr.rel (0) target = $region17
  $region16: #{sac_actor_forward.1} parent=0 // pred_region
    _
  $region17: #{sac_actor_forward.1} parent=0 // pred_fallthru
    _

</llo_original>
